<compile_context>
chip_gen: v7x
topology: tpu7x:2x2x1
jax: 0.10.0
libtpu: 0.0.40
codegen_flags: <defaults>
</compile_context>

<pallas_src>
import jax
import jax.numpy as jnp
from jax.experimental import pallas as pl
from jax.experimental.pallas import tpu as pltpu

HIDDEN = 256
LN_EPS = 1e-5                    # torch.nn.LayerNorm default
MAX_BATCH_TILE = 2048            # rows; keeps double-buffered blocks + f32
                                 # intermediates far below even v5e scoped VMEM
VMEM_LIMIT_BYTES = 32 * 1024 * 1024


def _round_up(n, m):
    return int(pl.cdiv(n, m)) * m


def _layernorm(x, gamma, beta):
    # Fused statistics: var = E[x^2] - mu^2 (one elementwise pass + two XLU
    # reductions instead of mean -> (x-mu)^2 -> mean).  PyTorch semantics:
    # biased variance, eps inside the rsqrt.  Zero pad-rows give var = 0 ->
    # rsqrt(eps) (finite); those rows are sliced off in the wrapper.
    mu = jnp.mean(x, axis=-1, keepdims=True)
    mean_sq = jnp.mean(x * x, axis=-1, keepdims=True)
    var = mean_sq - mu * mu
    inv = jax.lax.rsqrt(var + LN_EPS)
    return (x - mu) * inv * gamma + beta


# -----------------------------------------------------------------------------
# Scalar module
# -----------------------------------------------------------------------------
# TODO(synk): Scalar.forward() has no compute to map onto the MXU/VPU; the
# plain identity below is the production path (perf-review item: a kernel
# launch + SMEM DMA costs microseconds for zero work).  The SMEM pass-through
# kernel is kept only as the literal-spec demonstration.
def scalar_forward(constant):
    """Pallas-free equivalent of Scalar.forward(): returns the parameter."""
    return jnp.asarray(constant, jnp.float32)


def _scalar_kernel(c_ref, out_ref):
    out_ref[0, 0] = c_ref[0, 0]


def scalar_forward_pallas(constant):
    """Literal-spec demonstration: SMEM pass-through kernel returning the constant."""
    c = jnp.asarray(constant, jnp.float32).reshape(1, 1)
    out = pl.pallas_call(
        _scalar_kernel,
        out_shape=jax.ShapeDtypeStruct((1, 1), jnp.float32),
        in_specs=[pl.BlockSpec(memory_space=pltpu.MemorySpace.SMEM)],
        out_specs=pl.BlockSpec(memory_space=pltpu.MemorySpace.SMEM),
    )(c)
    return out[0, 0]


# -----------------------------------------------------------------------------
# CQL critic MLP kernel
# -----------------------------------------------------------------------------
def critic_kernel(x_ref,
                  g1_ref, be1_ref, w1_ref, b1_ref,
                  g2_ref, be2_ref, w2_ref, b2_ref,
                  g3_ref, be3_ref, w3_ref, b3_ref,
                  out_ref):
    # x ships as bf16 (halved input DMA); upcast once, keep LayerNorm math f32.
    x = x_ref[...].astype(jnp.float32)

    # norm1 -> linear1 -> relu   (bf16 MXU operands, f32 accumulation)
    h = _layernorm(x, g1_ref[...], be1_ref[...])
    h = jnp.dot(h.astype(jnp.bfloat16), w1_ref[...],
                preferred_element_type=jnp.float32) + b1_ref[...]
    h = jnp.maximum(h, 0.0)

    # norm2 -> linear2 -> relu
    h = _layernorm(h, g2_ref[...], be2_ref[...])
    h = jnp.dot(h.astype(jnp.bfloat16), w2_ref[...],
                preferred_element_type=jnp.float32) + b2_ref[...]
    h = jnp.maximum(h, 0.0)

    # norm3 -> final (256 -> 1) projection.  Exactly one real output column,
    # so instead of a zero-padded (256, 128) matmul (128x redundant MXU work,
    # 512 B/row of HBM writeback) do a VPU multiply against the broadcast
    # weight row and a single lane reduction, yielding the (tile, 1) q column
    # directly.  HBM writeback drops to 4 B/row; the tile/8 (masked) vector
    # stores land on an otherwise idle store slot.
    h = _layernorm(h, g3_ref[...], be3_ref[...])
    q = jnp.sum(h * w3_ref[...], axis=-1, keepdims=True) + b3_ref[...]
    out_ref[...] = q.astype(out_ref.dtype)


def _default_batch_tile(B):
    # >= 256 rows (MXU-friendly on v5e's 4x128^2 and v6e/v7x's 2x256^2);
    # for larger batches split into >= 2 tiles so v7x's two TensorCores both
    # get work via the "parallel" grid axis; cap at MAX_BATCH_TILE.
    if B <= 256:
        return 256
    return min(MAX_BATCH_TILE, _round_up(int(pl.cdiv(B, 2)), 256))


def critic_forward(state, action, kernel_params, *, batch_tile=None):
    """CQL critic forward.  `kernel_params` must come from prepare_params()."""
    B, state_dim = state.shape
    _, action_dim = action.shape
    in_dim = state_dim + action_dim

    (g1, be1, w1b, b1, g2, be2, w2b, b2, g3, be3, w3r, b3) = kernel_params

    # Concat hoisted out of the kernel (one cheap XLA op); ship x in bf16 so
    # the input DMA is halved.  The kernel upcasts before LayerNorm 1.
    x = jnp.concatenate([state, action], axis=1).astype(jnp.bfloat16)

    if batch_tile is None:
        batch_tile = _default_batch_tile(B)
    b_pad = _round_up(B, batch_tile)
    if b_pad != B:
        x = jnp.pad(x, ((0, b_pad - B), (0, 0)))   # zero rows: finite LN, sliced off

    grid = (b_pad // batch_tile,)

    def full(shape):
        # Constant index_map: block loaded once and kept VMEM-resident across
        # all grid steps (total parameter footprint ~0.2 MB).
        return pl.BlockSpec(shape, lambda i: (0, 0))

    in_specs = [
        pl.BlockSpec((batch_tile, in_dim), lambda i: (i, 0)),
        full((1, in_dim)), full((1, in_dim)), full((in_dim, HIDDEN)), full((1, HIDDEN)),
        full((1, HIDDEN)), full((1, HIDDEN)), full((HIDDEN, HIDDEN)), full((1, HIDDEN)),
        full((1, HIDDEN)), full((1, HIDDEN)), full((1, HIDDEN)), full((1, 1)),
    ]
    out_spec = pl.BlockSpec((batch_tile, 1), lambda i: (i, 0))

    out = pl.pallas_call(
        critic_kernel,
        out_shape=jax.ShapeDtypeStruct((b_pad, 1), jnp.float32),
        grid_spec=pltpu.PrefetchScalarGridSpec(
            num_scalar_prefetch=0,
            grid=grid,
            in_specs=in_specs,
            out_specs=out_spec,
        ),
        compiler_params=pltpu.CompilerParams(
            dimension_semantics=("parallel",),       # v7x's two TCs split the tiles
            vmem_limit_bytes=VMEM_LIMIT_BYTES,
        ),
    )(x, g1, be1, w1b, b1, g2, be2, w2b, b2, g3, be3, w3r, b3)

    return out[:B]


def prepare_params(params):
    """One-time (per parameter update) preprocessing of raw f32 parameters.

    Matmul weights -> bf16 (full-rate MXU on v6e/v7x, halved VMEM/HBM);
    final (256, 1) projection stored as a (1, 256) f32 row for the in-kernel
    VPU reduction.  Hoisted out of critic_forward so no per-call casts,
    pads, or extra HBM round trips happen on every forward.
    """
    (g1, be1, w1, b1, g2, be2, w2, b2, g3, be3, w3, b3) = params
    f32 = jnp.float32
    return (g1.astype(f32), be1.astype(f32),
            w1.astype(jnp.bfloat16), b1.astype(f32),
            g2.astype(f32), be2.astype(f32),
            w2.astype(jnp.bfloat16), b2.astype(f32),
            g3.astype(f32), be3.astype(f32),
            w3.astype(f32).reshape(1, HIDDEN), b3.astype(f32).reshape(1, 1))


def init_params(key, state_dim, action_dim):
    """Raw f32 parameters matching the module's shapes (PyTorch-style defaults).

    Linear weights stored transposed vs PyTorch, i.e. (in, out), so the kernel
    does x @ W directly.  Linear biases: U(-1/sqrt(fan_in), 1/sqrt(fan_in)).
    LayerNorm: weight=1, bias=0.
    """
    in_dim = state_dim + action_dim
    keys = jax.random.split(key, 6)

    def uniform(k, shape, fan_in):
        bound = 1.0 / jnp.sqrt(fan_in)
        return jax.random.uniform(k, shape, jnp.float32, -bound, bound)

    w1 = uniform(keys[0], (in_dim, HIDDEN), in_dim)
    b1 = uniform(keys[1], (1, HIDDEN), in_dim)
    w2 = uniform(keys[2], (HIDDEN, HIDDEN), HIDDEN)
    b2 = uniform(keys[3], (1, HIDDEN), HIDDEN)
    w3 = uniform(keys[4], (HIDDEN, 1), HIDDEN)
    b3 = uniform(keys[5], (1, 1), HIDDEN)

    g1 = jnp.ones((1, in_dim), jnp.float32)
    be1 = jnp.zeros((1, in_dim), jnp.float32)
    g2 = jnp.ones((1, HIDDEN), jnp.float32)
    be2 = jnp.zeros((1, HIDDEN), jnp.float32)
    g3 = jnp.ones((1, HIDDEN), jnp.float32)
    be3 = jnp.zeros((1, HIDDEN), jnp.float32)

    return (g1, be1, w1, b1, g2, be2, w2, b2, g3, be3, w3, b3)


def _layernorm_ref(x, gamma, beta):
    mu = jnp.mean(x, axis=-1, keepdims=True)
    var = jnp.mean((x - mu) * (x - mu), axis=-1, keepdims=True)
    return (x - mu) * jax.lax.rsqrt(var + LN_EPS) * gamma + beta


def critic_reference(state, action, raw_params):
    """Pure-JAX f32 reference of the same forward pass (correctness check)."""
    (g1, be1, w1, b1, g2, be2, w2, b2, g3, be3, w3, b3) = raw_params
    x = jnp.concatenate([state, action], axis=1)
    h = _layernorm_ref(x, g1, be1)
    h = jnp.maximum(h @ w1 + b1, 0.0)
    h = _layernorm_ref(h, g2, be2)
    h = jnp.maximum(h @ w2 + b2, 0.0)
    h = _layernorm_ref(h, g3, be3)
    return h @ w3 + b3


if __name__ == "__main__":
    key = jax.random.PRNGKey(0)
    k_params, k_s1, k_a1, k_s2, k_a2 = jax.random.split(key, 5)

    state_dim, action_dim = 24, 8
    raw_params = init_params(k_params, state_dim, action_dim)
    kernel_params = prepare_params(raw_params)     # once, not per forward

    # Scalar module (the literal spec): forward() returns the constant.
    alpha = jax.block_until_ready(scalar_forward(jnp.float32(0.5)))
    assert abs(float(alpha) - 0.5) < 1e-6
    alpha_k = jax.block_until_ready(scalar_forward_pallas(jnp.float32(0.5)))
    assert abs(float(alpha_k) - 0.5) < 1e-6

    # Critic, small batch (padded internally to a single 256-row tile).
    batch = 8
    state = jax.random.normal(k_s1, (batch, state_dim), jnp.float32)
    action = jax.random.normal(k_a1, (batch, action_dim), jnp.float32)
    q = jax.block_until_ready(critic_forward(state, action, kernel_params))
    q_ref = critic_reference(state, action, raw_params)
    assert q.shape == (batch, 1)
    # bf16 input/matmul operands (f32 accumulation) vs pure-f32 reference.
    assert jnp.allclose(q, q_ref, atol=5e-2, rtol=5e-2)

    # Critic, ragged batch: default tile -> 512-row tiles, grid=(2,), so v7x's
    # two TensorCores each take a tile; also exercises the tail-padding path.
    batch2 = 520
    state2 = jax.random.normal(k_s2, (batch2, state_dim), jnp.float32)
    action2 = jax.random.normal(k_a2, (batch2, action_dim), jnp.float32)
    q2 = jax.block_until_ready(critic_forward(state2, action2, kernel_params))
    q2_ref = critic_reference(state2, action2, raw_params)
    assert q2.shape == (batch2, 1)
    assert jnp.allclose(q2, q2_ref, atol=5e-2, rtol=5e-2)

    print("KERNEL_OK")
</pallas_src>

<mosaic_0001>
module attributes {stable_mosaic.version = 11 : i64} {
  func.func @_scalar_kernel(%arg0: memref<1x1xf32, #tpu.memory_space<smem>>, %arg1: memref<1x1xf32, #tpu.memory_space<smem>>) attributes {dimension_semantics = [], scalar_prefetch = 0 : i64, scratch_operands = 0 : i64, tpu.core_type = #tpu.core_type<tc>} {
    %c0 = arith.constant 0 : index
    %c0_0 = arith.constant 0 : index
    %0 = memref.load %arg0[%c0, %c0_0] : memref<1x1xf32, #tpu.memory_space<smem>>
    %c0_1 = arith.constant 0 : index
    %c0_2 = arith.constant 0 : index
    %1 = memref.load %arg1[%c0_1, %c0_2] : memref<1x1xf32, #tpu.memory_space<smem>>
    memref.store %0, %arg1[%c0_1, %c0_2] : memref<1x1xf32, #tpu.memory_space<smem>>
    return
  }
}

</mosaic_0001>

<llo_original>
// kernel: tpu_custom_call.1
$region0: #{tpu_custom_call.1}
  #allocation0 [shape = 'u32[]', space=smem, size = 0x4, offset = 0x4, fixed_abs, tag = 'smem constant byte address 0x4 - core index']
  #allocation1 [shape = 'u32[144,128]{1,0:T(1,128)}', space=vmem, size = 0x12000, scoped, tag = 'internal scratch']
  #allocation2 [shape = 'f32[1,1]{1,0:T(1,128)S(6)}', space=smem, size = 0x200, scoped, tag = 'scoped memory for tpu_custom_call.1']
  %s0 = inlined_call_operand.<no memory space> [shape: f32[1,1], index: 0, kind: input, shape index: {}]
  %s1 = inlined_call_operand.hbm [shape: f32[1,1], index: 1, kind: output, shape index: {}]
  %s2 = sld [smem:[#allocation0]]
  $region14: #{tpu_custom_call.1} parent=0
    _
  %s4 = ssub.s32 1, %s2
  %s5 = scalar_select 0, %s4, %s2
  %6 = sst [smem:[#allocation2]] %s0
  $region1: #{tpu_custom_call.1} parent=0
    #allocation3 [shape = 'u8[512]{0}', space=smem, size = 0x200, scoped, tag = 'output window, operand 0, single buffered']
    #allocation4 [shape = 's32[1]{0}', space=sflag, size = 0x4, scoped, tag = 'scoped memory for tpu_custom_call.1']
    %7 = vsyncpa [#allocation4], 0
    // Predicated region
    $region2: #{tpu_custom_call.1} parent=1 // pred_check
      _
    $region3: #{tpu_custom_call.1} parent=1 // pred_check_branch
      %9 = sbr.rel (0) target = $region5
    $region4: #{tpu_custom_call.1} parent=1 // pred_region
      _
    $region5: #{tpu_custom_call.1} parent=1 // pred_fallthru
      _
    %s10 = sld [smem:[#allocation2]]
    %s11 = scalar_lea.smem [#allocation3], 0
    %12 = sst [smem:[%s11]] %s10
    // Predicated region
    $region6: #{tpu_custom_call.1} parent=1 // pred_check
      _
    $region7: #{tpu_custom_call.1} parent=1 // pred_check_branch
      %14 = sbr.rel (0) target = $region9
    $region8: #{tpu_custom_call.1} parent=1 // pred_region
      %s16 = ssub.s32 16, 16
      %17 = vsyncadd [#allocation4], %s16
      %20 = dma.smem_to_hbm [#allocation3], 16, %s1, [#allocation4]
    $region9: #{tpu_custom_call.1} parent=1 // pred_fallthru
      _
    // Predicated region
    $region10: #{tpu_custom_call.1} parent=1 // pred_check
      _
    $region11: #{tpu_custom_call.1} parent=1 // pred_check_branch
      %22 = sbr.rel (0) target = $region13
    $region12: #{tpu_custom_call.1} parent=1 // pred_region
      %23 = dma.done [#allocation4], 16
    $region13: #{tpu_custom_call.1} parent=1 // pred_fallthru
      _
    %24 = sfence
    %25 = vsyncpa [#allocation4], 1

</llo_original>
